<compile_context>
chip_gen: v6e
topology: v6e:2x2x1
jax: 0.10.0
libtpu: 0.0.40
codegen_flags: <defaults>
</compile_context>

<pallas_src>
import functools

import jax
import jax.numpy as jnp
from jax.experimental import pallas as pl
from jax.experimental.pallas import tpu as pltpu


# ----------------------------------------------------------------------------
# Shared cell math (operates on loaded VMEM values).
# ----------------------------------------------------------------------------
def _cell_compute(x, h, cn, dt,
                  wg, bg, w1, b1, w2, b2, w3, b3, centers, sel,
                  *, H, DN, dims, nbf, scale):
    # ---- GRUCell, fused into one matmul --------------------------------------
    xh = jnp.concatenate([x, h], axis=1)                       # [B, dims+H]
    g = jnp.dot(xh, wg, preferred_element_type=jnp.float32) + bg   # [B, 4H]
    rz = jax.nn.sigmoid(g[:, 0:2 * H])
    r = rz[:, 0:H]
    z = rz[:, H:2 * H]
    n = jnp.tanh(g[:, 2 * H:3 * H] + r * g[:, 3 * H:4 * H])
    h_new = (1.0 - z) * n + z * h                              # [B, H]

    # ---- kin/phase layer 1, fused: [cn | h_new] @ [k1 | p1] ------------------
    ch = jnp.concatenate([cn, h_new], axis=1)                  # [B, C+H]
    l1 = jnp.maximum(jnp.dot(ch, w1, preferred_element_type=jnp.float32) + b1,
                     0.0)                                      # [B, DN+Hp]

    # ---- kin layer 2 + phase layer 2, fused block-diagonal -------------------
    l2 = jnp.dot(l1, w2, preferred_element_type=jnp.float32) + b2   # [B, DN+1]
    k2r = jnp.maximum(l2[:, 0:DN], 0.0)
    p = l2[:, DN:DN + 1]

    # ---- kin layer 3 ----------------------------------------------------------
    w_flat = jnp.dot(k2r, w3, preferred_element_type=jnp.float32) + b3   # [B, DN]

    # ---- phase: Hardsigmoid + dt ----------------------------------------------
    phase = jnp.clip(p * (1.0 / 6.0) + 0.5, 0.0, 1.0) + dt     # [B, 1]

    # ---- basis model: normalized Gaussian RBFs + selector matmul ---------------
    diff = phase - centers                                     # [B, nbf]
    psi = jnp.exp(diff * diff * (-0.5 / scale))
    inv = pl.reciprocal(jnp.sum(psi, axis=-1, keepdims=True) + 1e-8, approx=True)
    psi_n = psi * inv
    wpsi = w_flat * jnp.tile(psi_n, (1, dims))                 # [B, DN]
    action = jnp.dot(wpsi, sel, preferred_element_type=jnp.float32)   # [B, dims]
    return h_new, w_flat, phase, action


def _pack_outputs(h_new, w_flat, phase, action, pad):
    parts = [h_new, w_flat, phase, action]
    if pad:
        parts.append(jnp.zeros((h_new.shape[0], pad), jnp.float32))
    return jnp.concatenate(parts, axis=1)


# ----------------------------------------------------------------------------
# Single-step kernel (matches the module's forward exactly, training=False).
# ----------------------------------------------------------------------------
def _fbc_step_kernel(x_ref, h_ref, cn_ref, dt_ref,
                     wg_ref, bg_ref, w1_ref, b1_ref, w2_ref, b2_ref,
                     w3_ref, b3_ref, centers_ref, sel_ref,
                     out_ref, *, H, DN, dims, nbf, scale, pad):
    h_new, w_flat, phase, action = _cell_compute(
        x_ref[...], h_ref[...], cn_ref[...], dt_ref[...],
        wg_ref[...], bg_ref[...], w1_ref[...], b1_ref[...],
        w2_ref[...], b2_ref[...], w3_ref[...], b3_ref[...],
        centers_ref[...], sel_ref[...],
        H=H, DN=DN, dims=dims, nbf=nbf, scale=scale)
    out_ref[...] = _pack_outputs(h_new, w_flat, phase, action, pad)


# ----------------------------------------------------------------------------
# Sequence kernel: T steps inside one pallas_call, hidden state resident.
# ----------------------------------------------------------------------------
def _fbc_seq_kernel(x_ref, h0_ref, cn_ref, dt_ref,
                    wg_ref, bg_ref, w1_ref, b1_ref, w2_ref, b2_ref,
                    w3_ref, b3_ref, centers_ref, sel_ref,
                    out_ref, h_scr, *, H, DN, dims, nbf, scale, pad):
    t = pl.program_id(0)

    @pl.when(t == 0)
    def _():
        h_scr[...] = h0_ref[...]

    h_new, w_flat, phase, action = _cell_compute(
        x_ref[0], h_scr[...], cn_ref[...], dt_ref[...],
        wg_ref[...], bg_ref[...], w1_ref[...], b1_ref[...],
        w2_ref[...], b2_ref[...], w3_ref[...], b3_ref[...],
        centers_ref[...], sel_ref[...],
        H=H, DN=DN, dims=dims, nbf=nbf, scale=scale)
    h_scr[...] = h_new
    out_ref[0] = _pack_outputs(h_new, w_flat, phase, action, pad)


# ----------------------------------------------------------------------------
# Wrappers
# ----------------------------------------------------------------------------
def _packed_width(H, DN, dims):
    used = H + DN + 1 + dims
    P = 128 * pl.cdiv(used, 128)
    return used, P, P - used


def _split_packed(packed, H, DN, dims):
    gru_out = packed[..., 0:H]
    w_flat = packed[..., H:H + DN]
    phase = packed[..., H + DN:H + DN + 1]
    action = packed[..., H + DN + 1:H + DN + 1 + dims]
    return gru_out, w_flat, phase, action


def feedback_controller_cell(inputs, states, constants, params, *,
                             robot_state_size, dims, n_bfuncs, cnfeatures_size,
                             scale=0.012):
    """Inference path (training=False) of FeedBackControllerCellTorch.forward."""
    in_robot = inputs
    _, st_gru_last = states          # st_robot_last only used when training=True
    cn_features, cn_delta_t = constants
    B = in_robot.shape[0]
    H = robot_state_size
    DN = dims * n_bfuncs
    _, P, pad = _packed_width(H, DN, dims)

    dt = (jnp.float32(1.0) / (500.0 * jnp.asarray(cn_delta_t, jnp.float32))).reshape(1, 1)

    vmem = pl.BlockSpec(memory_space=pltpu.MemorySpace.VMEM)
    kernel = functools.partial(_fbc_step_kernel, H=H, DN=DN, dims=dims,
                               nbf=n_bfuncs, scale=scale, pad=pad)

    packed = pl.pallas_call(
        kernel,
        out_shape=jax.ShapeDtypeStruct((B, P), jnp.float32),
        in_specs=[vmem] * 14,
        out_specs=vmem,
    )(
        in_robot, st_gru_last, cn_features, dt,
        params["wg"], params["bg"], params["w1"], params["b1"],
        params["w2"], params["b2"], params["w3"], params["b3"],
        params["centers"], params["sel"],
    )

    gru_out, w_flat, phase, action = _split_packed(packed, H, DN, dims)
    weights = w_flat.reshape(B, dims, n_bfuncs)
    # matches: ((action, phase, weights), gru_output)
    return (action, phase, weights), gru_out


def feedback_controller_sequence(inputs_seq, st_gru_init, constants, params, *,
                                 robot_state_size, dims, n_bfuncs,
                                 cnfeatures_size, scale=0.012):
    """Step the cell over a [T, B, dims] sequence in ONE pallas_call.

    Grid axis T is "arbitrary"; the hidden state lives in a VMEM scratch that
    persists across grid iterations (amortizes per-invocation launch cost).
    """
    cn_features, cn_delta_t = constants
    T, B, Din = inputs_seq.shape
    H = robot_state_size
    DN = dims * n_bfuncs
    C = cn_features.shape[1]
    _, P, pad = _packed_width(H, DN, dims)

    dt = (jnp.float32(1.0) / (500.0 * jnp.asarray(cn_delta_t, jnp.float32))).reshape(1, 1)

    kernel = functools.partial(_fbc_seq_kernel, H=H, DN=DN, dims=dims,
                               nbf=n_bfuncs, scale=scale, pad=pad)

    weight_args = (params["wg"], params["bg"], params["w1"], params["b1"],
                   params["w2"], params["b2"], params["w3"], params["b3"],
                   params["centers"], params["sel"])

    def whole(a):
        # Whole-array block, resident across the T loop (constant block index).
        return pl.BlockSpec(a.shape, lambda t: (0,) * a.ndim)

    in_specs = ([pl.BlockSpec((1, B, Din), lambda t: (t, 0, 0)),   # x_t streamed
                 pl.BlockSpec((B, H), lambda t: (0, 0)),           # h0 resident
                 pl.BlockSpec((B, C), lambda t: (0, 0)),           # cn resident
                 pl.BlockSpec((1, 1), lambda t: (0, 0))]           # dt resident
                + [whole(w) for w in weight_args])

    packed = pl.pallas_call(
        kernel,
        out_shape=jax.ShapeDtypeStruct((T, B, P), jnp.float32),
        grid=(T,),
        in_specs=in_specs,
        out_specs=pl.BlockSpec((1, B, P), lambda t: (t, 0, 0)),
        scratch_shapes=[pltpu.VMEM((B, H), jnp.float32)],
        compiler_params=pltpu.CompilerParams(
            dimension_semantics=("arbitrary",)),
    )(inputs_seq, st_gru_init, cn_features, dt, *weight_args)

    gru_out, w_flat, phase, action = _split_packed(packed, H, DN, dims)
    weights = w_flat.reshape(T, B, dims, n_bfuncs)
    return (action, phase, weights), gru_out


# ----------------------------------------------------------------------------
# Synthetic parameters (PyTorch-style layout), packed host-side for the kernel.
# ----------------------------------------------------------------------------
def init_params(key, *, robot_state_size, dims, n_bfuncs, cnfeatures_size):
    H = robot_state_size
    C = cnfeatures_size
    DN = dims * n_bfuncs
    Hp = int(H / 2.0)
    Xs = H + C

    def unif(k, shape, fan_in):
        s = 1.0 / jnp.sqrt(jnp.float32(fan_in))
        return jax.random.uniform(k, shape, jnp.float32, -s, s)

    ks = jax.random.split(key, 14)
    # PyTorch-layout weights (weight[out, in]).
    w_ih = unif(ks[0], (3 * H, dims), H)
    w_hh = unif(ks[1], (3 * H, H), H)
    b_ih = unif(ks[2], (3 * H,), H)
    b_hh = unif(ks[3], (3 * H,), H)
    k1 = unif(ks[4], (DN, Xs), Xs)
    kb1 = unif(ks[5], (DN,), Xs)
    k2 = unif(ks[6], (DN, DN), DN)
    kb2 = unif(ks[7], (DN,), DN)
    k3 = unif(ks[8], (DN, DN), DN)
    kb3 = unif(ks[9], (DN,), DN)
    p1 = unif(ks[10], (Hp, Xs), Xs)
    pb1 = unif(ks[11], (Hp,), Xs)
    p2 = unif(ks[12], (1, Hp), Hp)
    pb2 = unif(ks[13], (1,), Hp)

    # ---- GRU packed: [x | h] @ wg -> columns (r, z, i_n, h_n) ----
    wiT = w_ih.T                    # [dims, 3H]
    whT = w_hh.T                    # [H, 3H]
    wg = jnp.zeros((dims + H, 4 * H), jnp.float32)
    wg = wg.at[:dims, 0:H].set(wiT[:, 0:H])
    wg = wg.at[dims:, 0:H].set(whT[:, 0:H])
    wg = wg.at[:dims, H:2 * H].set(wiT[:, H:2 * H])
    wg = wg.at[dims:, H:2 * H].set(whT[:, H:2 * H])
    wg = wg.at[:dims, 2 * H:3 * H].set(wiT[:, 2 * H:3 * H])
    wg = wg.at[dims:, 3 * H:4 * H].set(whT[:, 2 * H:3 * H])
    bg = jnp.concatenate([b_ih[0:H] + b_hh[0:H],
                          b_ih[H:2 * H] + b_hh[H:2 * H],
                          b_ih[2 * H:3 * H],
                          b_hh[2 * H:3 * H]]).reshape(1, 4 * H)

    # ---- kin/phase layer 1 fused: [cn | h_new] @ [k1 | p1] ----
    w1 = jnp.concatenate([k1.T, p1.T], axis=1)                 # [Xs, DN+Hp]
    b1 = jnp.concatenate([kb1, pb1]).reshape(1, DN + Hp)

    # ---- kin layer 2 + phase layer 2 fused as block-diagonal ----
    w2 = jnp.zeros((DN + Hp, DN + 1), jnp.float32)
    w2 = w2.at[0:DN, 0:DN].set(k2.T)
    w2 = w2.at[DN:, DN:DN + 1].set(p2.T)
    b2 = jnp.concatenate([kb2, pb2]).reshape(1, DN + 1)

    w3 = k3.T
    b3 = kb3.reshape(1, DN)

    # ---- basis: RBF centers + 0/1 block-selection matrix for per-dim sums ----
    centers = jnp.linspace(0.0, 1.0, n_bfuncs, dtype=jnp.float32).reshape(1, n_bfuncs)
    sel = jnp.zeros((DN, dims), jnp.float32)
    for d in range(dims):
        sel = sel.at[d * n_bfuncs:(d + 1) * n_bfuncs, d].set(1.0)

    return {"wg": wg, "bg": bg, "w1": w1, "b1": b1, "w2": w2, "b2": b2,
            "w3": w3, "b3": b3, "centers": centers, "sel": sel}


if __name__ == "__main__":
    # Small shapes consistent with the module. Batch != 2 so the reproduced GRU
    # branch x = cat(cn_features, gru_output) (len(tensor)==B) is the right one.
    B = 8
    robot_state_size = 32
    dims = 4
    n_bfuncs = 8
    cnfeatures_size = 5
    T = 6

    key = jax.random.PRNGKey(0)
    k_in, k_seq, k_st_r, k_st_g, k_cn, k_par = jax.random.split(key, 6)

    inputs = jax.random.normal(k_in, (B, dims), jnp.float32)
    inputs_seq = jax.random.normal(k_seq, (T, B, dims), jnp.float32)
    st_robot_last = jax.random.normal(k_st_r, (B, dims), jnp.float32)
    st_gru_last = jax.random.normal(k_st_g, (B, robot_state_size), jnp.float32)
    cn_features = jax.random.normal(k_cn, (B, cnfeatures_size), jnp.float32)
    cn_delta_t = jnp.float32(0.002)

    params = init_params(k_par, robot_state_size=robot_state_size, dims=dims,
                         n_bfuncs=n_bfuncs, cnfeatures_size=cnfeatures_size)

    cell = jax.jit(functools.partial(
        feedback_controller_cell, robot_state_size=robot_state_size, dims=dims,
        n_bfuncs=n_bfuncs, cnfeatures_size=cnfeatures_size))
    seq = jax.jit(functools.partial(
        feedback_controller_sequence, robot_state_size=robot_state_size,
        dims=dims, n_bfuncs=n_bfuncs, cnfeatures_size=cnfeatures_size))

    # --- single-cell forward (module semantics) -------------------------------
    (action, phase, weights), gru_out = cell(
        inputs, (st_robot_last, st_gru_last), (cn_features, cn_delta_t), params)
    jax.block_until_ready((action, phase, weights, gru_out))
    assert action.shape == (B, dims)
    assert phase.shape == (B, 1)
    assert weights.shape == (B, dims, n_bfuncs)
    assert gru_out.shape == (B, robot_state_size)

    # --- sequence rollout in one kernel (grid over T, resident hidden state) ---
    (a_seq, p_seq, w_seq), g_seq = seq(
        inputs_seq, st_gru_last, (cn_features, cn_delta_t), params)
    jax.block_until_ready((a_seq, p_seq, w_seq, g_seq))
    assert a_seq.shape == (T, B, dims)
    assert p_seq.shape == (T, B, 1)
    assert w_seq.shape == (T, B, dims, n_bfuncs)
    assert g_seq.shape == (T, B, robot_state_size)

    # --- consistency: sequence kernel == stepping the single-cell kernel -------
    h = st_gru_last
    for t in range(T):
        (a_t, p_t, w_t), h = cell(
            inputs_seq[t], (st_robot_last, h), (cn_features, cn_delta_t), params)
    ok = (bool(jnp.allclose(a_t, a_seq[-1], atol=1e-4, rtol=1e-3))
          and bool(jnp.allclose(p_t, p_seq[-1], atol=1e-4, rtol=1e-3))
          and bool(jnp.allclose(w_t, w_seq[-1], atol=1e-4, rtol=1e-3))
          and bool(jnp.allclose(h, g_seq[-1], atol=1e-4, rtol=1e-3)))
    assert ok, "sequence kernel disagrees with repeated single-step kernel"

    print("KERNEL_OK")
</pallas_src>

<mosaic_0001>
module attributes {stable_mosaic.version = 11 : i64} {
  func.func @_fbc_step_kernel(%arg0: memref<8x4xf32, #tpu.memory_space<vmem>>, %arg1: memref<8x32xf32, #tpu.memory_space<vmem>>, %arg2: memref<8x5xf32, #tpu.memory_space<vmem>>, %arg3: memref<1x1xf32, #tpu.memory_space<vmem>>, %arg4: memref<36x128xf32, #tpu.memory_space<vmem>>, %arg5: memref<1x128xf32, #tpu.memory_space<vmem>>, %arg6: memref<37x48xf32, #tpu.memory_space<vmem>>, %arg7: memref<1x48xf32, #tpu.memory_space<vmem>>, %arg8: memref<48x33xf32, #tpu.memory_space<vmem>>, %arg9: memref<1x33xf32, #tpu.memory_space<vmem>>, %arg10: memref<32x32xf32, #tpu.memory_space<vmem>>, %arg11: memref<1x32xf32, #tpu.memory_space<vmem>>, %arg12: memref<1x8xf32, #tpu.memory_space<vmem>>, %arg13: memref<32x4xf32, #tpu.memory_space<vmem>>, %arg14: memref<8x128xf32, #tpu.memory_space<vmem>>) attributes {dimension_semantics = [], scalar_prefetch = 0 : i64, scratch_operands = 0 : i64, tpu.core_type = #tpu.core_type<tc>} {
    %c0 = arith.constant 0 : index
    %c0_0 = arith.constant 0 : index
    %0 = vector.load %arg0[%c0, %c0_0] : memref<8x4xf32, #tpu.memory_space<vmem>>, vector<8x4xf32>
    %c0_1 = arith.constant 0 : index
    %c0_2 = arith.constant 0 : index
    %1 = vector.load %arg1[%c0_1, %c0_2] : memref<8x32xf32, #tpu.memory_space<vmem>>, vector<8x32xf32>
    %c0_3 = arith.constant 0 : index
    %c0_4 = arith.constant 0 : index
    %2 = vector.load %arg2[%c0_3, %c0_4] : memref<8x5xf32, #tpu.memory_space<vmem>>, vector<8x5xf32>
    %c0_5 = arith.constant 0 : index
    %c0_6 = arith.constant 0 : index
    %3 = vector.load %arg3[%c0_5, %c0_6] : memref<1x1xf32, #tpu.memory_space<vmem>>, vector<1x1xf32>
    %c0_7 = arith.constant 0 : index
    %c0_8 = arith.constant 0 : index
    %4 = vector.load %arg4[%c0_7, %c0_8] : memref<36x128xf32, #tpu.memory_space<vmem>>, vector<36x128xf32>
    %c0_9 = arith.constant 0 : index
    %c0_10 = arith.constant 0 : index
    %5 = vector.load %arg5[%c0_9, %c0_10] : memref<1x128xf32, #tpu.memory_space<vmem>>, vector<1x128xf32>
    %c0_11 = arith.constant 0 : index
    %c0_12 = arith.constant 0 : index
    %6 = vector.load %arg6[%c0_11, %c0_12] : memref<37x48xf32, #tpu.memory_space<vmem>>, vector<37x48xf32>
    %c0_13 = arith.constant 0 : index
    %c0_14 = arith.constant 0 : index
    %7 = vector.load %arg7[%c0_13, %c0_14] : memref<1x48xf32, #tpu.memory_space<vmem>>, vector<1x48xf32>
    %c0_15 = arith.constant 0 : index
    %c0_16 = arith.constant 0 : index
    %8 = vector.load %arg8[%c0_15, %c0_16] : memref<48x33xf32, #tpu.memory_space<vmem>>, vector<48x33xf32>
    %c0_17 = arith.constant 0 : index
    %c0_18 = arith.constant 0 : index
    %9 = vector.load %arg9[%c0_17, %c0_18] : memref<1x33xf32, #tpu.memory_space<vmem>>, vector<1x33xf32>
    %c0_19 = arith.constant 0 : index
    %c0_20 = arith.constant 0 : index
    %10 = vector.load %arg10[%c0_19, %c0_20] : memref<32x32xf32, #tpu.memory_space<vmem>>, vector<32x32xf32>
    %c0_21 = arith.constant 0 : index
    %c0_22 = arith.constant 0 : index
    %11 = vector.load %arg11[%c0_21, %c0_22] : memref<1x32xf32, #tpu.memory_space<vmem>>, vector<1x32xf32>
    %c0_23 = arith.constant 0 : index
    %c0_24 = arith.constant 0 : index
    %12 = vector.load %arg12[%c0_23, %c0_24] : memref<1x8xf32, #tpu.memory_space<vmem>>, vector<1x8xf32>
    %c0_25 = arith.constant 0 : index
    %c0_26 = arith.constant 0 : index
    %13 = vector.load %arg13[%c0_25, %c0_26] : memref<32x4xf32, #tpu.memory_space<vmem>>, vector<32x4xf32>
    %14 = tpu.concatenate %0, %1 in 1 : vector<8x4xf32>, vector<8x32xf32> -> vector<8x36xf32>
    %cst = arith.constant dense<0.000000e+00> : vector<8x128xf32>
    %15 = tpu.matmul %14, %4, %cst {dimension_numbers = #tpu.dot_dimension_numbers<[1], [0], [0], [1], [0, 0, 1, 1], [], []>} : vector<8x36xf32>, vector<36x128xf32>, vector<8x128xf32> -> vector<8x128xf32>
    %16 = vector.broadcast %5 : vector<1x128xf32> to vector<8x128xf32>
    %17 = arith.addf %15, %16 : vector<8x128xf32>
    %18 = vector.extract_strided_slice %17 {offsets = [0, 0], sizes = [8, 64], strides = [1, 1]} : vector<8x128xf32> to vector<8x64xf32>
    %19 = arith.negf %18 : vector<8x64xf32>
    %20 = math.exp %19 : vector<8x64xf32>
    %cst_27 = arith.constant 1.000000e+00 : f32
    %21 = vector.broadcast %cst_27 : f32 to vector<8x64xf32>
    %22 = arith.addf %21, %20 : vector<8x64xf32>
    %23 = arith.divf %21, %22 : vector<8x64xf32>
    %24 = vector.extract_strided_slice %23 {offsets = [0, 0], sizes = [8, 32], strides = [1, 1]} : vector<8x64xf32> to vector<8x32xf32>
    %25 = vector.extract_strided_slice %23 {offsets = [0, 32], sizes = [8, 32], strides = [1, 1]} : vector<8x64xf32> to vector<8x32xf32>
    %26 = vector.extract_strided_slice %17 {offsets = [0, 64], sizes = [8, 32], strides = [1, 1]} : vector<8x128xf32> to vector<8x32xf32>
    %27 = vector.extract_strided_slice %17 {offsets = [0, 96], sizes = [8, 32], strides = [1, 1]} : vector<8x128xf32> to vector<8x32xf32>
    %28 = arith.mulf %24, %27 : vector<8x32xf32>
    %29 = arith.addf %26, %28 : vector<8x32xf32>
    %30 = math.tanh %29 : vector<8x32xf32>
    %cst_28 = arith.constant 1.000000e+00 : f32
    %31 = vector.broadcast %cst_28 : f32 to vector<8x32xf32>
    %32 = arith.subf %31, %25 : vector<8x32xf32>
    %33 = arith.mulf %32, %30 : vector<8x32xf32>
    %34 = arith.mulf %25, %1 : vector<8x32xf32>
    %35 = arith.addf %33, %34 : vector<8x32xf32>
    %36 = tpu.concatenate %2, %35 in 1 : vector<8x5xf32>, vector<8x32xf32> -> vector<8x37xf32>
    %cst_29 = arith.constant dense<0.000000e+00> : vector<8x48xf32>
    %37 = tpu.matmul %36, %6, %cst_29 {dimension_numbers = #tpu.dot_dimension_numbers<[1], [0], [0], [1], [0, 0, 1, 1], [], []>} : vector<8x37xf32>, vector<37x48xf32>, vector<8x48xf32> -> vector<8x48xf32>
    %38 = vector.broadcast %7 : vector<1x48xf32> to vector<8x48xf32>
    %39 = arith.addf %37, %38 : vector<8x48xf32>
    %cst_30 = arith.constant 0.000000e+00 : f32
    %40 = vector.broadcast %cst_30 : f32 to vector<8x48xf32>
    %41 = arith.maximumf %39, %40 : vector<8x48xf32>
    %cst_31 = arith.constant dense<0.000000e+00> : vector<8x33xf32>
    %42 = tpu.matmul %41, %8, %cst_31 {dimension_numbers = #tpu.dot_dimension_numbers<[1], [0], [0], [1], [0, 0, 1, 1], [], []>} : vector<8x48xf32>, vector<48x33xf32>, vector<8x33xf32> -> vector<8x33xf32>
    %43 = vector.broadcast %9 : vector<1x33xf32> to vector<8x33xf32>
    %44 = arith.addf %42, %43 : vector<8x33xf32>
    %45 = vector.extract_strided_slice %44 {offsets = [0, 0], sizes = [8, 32], strides = [1, 1]} : vector<8x33xf32> to vector<8x32xf32>
    %cst_32 = arith.constant 0.000000e+00 : f32
    %46 = vector.broadcast %cst_32 : f32 to vector<8x32xf32>
    %47 = arith.maximumf %45, %46 : vector<8x32xf32>
    %48 = vector.extract_strided_slice %44 {offsets = [0, 32], sizes = [8, 1], strides = [1, 1]} : vector<8x33xf32> to vector<8x1xf32>
    %cst_33 = arith.constant dense<0.000000e+00> : vector<8x32xf32>
    %49 = tpu.matmul %47, %10, %cst_33 {dimension_numbers = #tpu.dot_dimension_numbers<[1], [0], [0], [1], [0, 0, 1, 1], [], []>} : vector<8x32xf32>, vector<32x32xf32>, vector<8x32xf32> -> vector<8x32xf32>
    %50 = vector.broadcast %11 : vector<1x32xf32> to vector<8x32xf32>
    %51 = arith.addf %49, %50 : vector<8x32xf32>
    %cst_34 = arith.constant 0.166666672 : f32
    %52 = vector.broadcast %cst_34 : f32 to vector<8x1xf32>
    %53 = arith.mulf %48, %52 : vector<8x1xf32>
    %cst_35 = arith.constant 5.000000e-01 : f32
    %54 = vector.broadcast %cst_35 : f32 to vector<8x1xf32>
    %55 = arith.addf %53, %54 : vector<8x1xf32>
    %cst_36 = arith.constant 0.000000e+00 : f32
    %cst_37 = arith.constant 1.000000e+00 : f32
    %56 = vector.broadcast %cst_36 : f32 to vector<8x1xf32>
    %57 = arith.maximumf %56, %55 : vector<8x1xf32>
    %58 = vector.broadcast %cst_37 : f32 to vector<8x1xf32>
    %59 = arith.minimumf %58, %57 : vector<8x1xf32>
    %60 = vector.broadcast %3 : vector<1x1xf32> to vector<8x1xf32>
    %61 = arith.addf %59, %60 : vector<8x1xf32>
    %62 = vector.broadcast %61 : vector<8x1xf32> to vector<8x8xf32>
    %63 = vector.broadcast %12 : vector<1x8xf32> to vector<8x8xf32>
    %64 = arith.subf %62, %63 : vector<8x8xf32>
    %65 = arith.mulf %64, %64 : vector<8x8xf32>
    %cst_38 = arith.constant -41.6666679 : f32
    %66 = vector.broadcast %cst_38 : f32 to vector<8x8xf32>
    %67 = arith.mulf %65, %66 : vector<8x8xf32>
    %68 = math.exp %67 : vector<8x8xf32>
    %cst_39 = arith.constant dense<0.000000e+00> : vector<8xf32>
    %69 = vector.multi_reduction <add>, %68, %cst_39 [1] : vector<8x8xf32> to vector<8xf32>
    %70 = vector.shape_cast %69 : vector<8xf32> to vector<8x1xf32>
    %cst_40 = arith.constant 9.99999993E-9 : f32
    %71 = vector.broadcast %cst_40 : f32 to vector<8x1xf32>
    %72 = arith.addf %70, %71 : vector<8x1xf32>
    %73 = tpu.reciprocal %72 {approx = true} : vector<8x1xf32> -> vector<8x1xf32>
    %74 = vector.broadcast %73 : vector<8x1xf32> to vector<8x8xf32>
    %75 = arith.mulf %68, %74 : vector<8x8xf32>
    %76 = tpu.concatenate %75, %75, %75, %75 in 1 : vector<8x8xf32>, vector<8x8xf32>, vector<8x8xf32>, vector<8x8xf32> -> vector<8x32xf32>
    %77 = arith.mulf %51, %76 : vector<8x32xf32>
    %cst_41 = arith.constant dense<0.000000e+00> : vector<8x4xf32>
    %78 = tpu.matmul %77, %13, %cst_41 {dimension_numbers = #tpu.dot_dimension_numbers<[1], [0], [0], [1], [0, 0, 1, 1], [], []>} : vector<8x32xf32>, vector<32x4xf32>, vector<8x4xf32> -> vector<8x4xf32>
    %cst_42 = arith.constant 0.000000e+00 : f32
    %79 = vector.broadcast %cst_42 : f32 to vector<8x59xf32>
    %80 = tpu.concatenate %35, %51, %61, %78, %79 in 1 : vector<8x32xf32>, vector<8x32xf32>, vector<8x1xf32>, vector<8x4xf32>, vector<8x59xf32> -> vector<8x128xf32>
    %c0_43 = arith.constant 0 : index
    %c0_44 = arith.constant 0 : index
    %81 = vector.load %arg14[%c0_43, %c0_44] : memref<8x128xf32, #tpu.memory_space<vmem>>, vector<8x128xf32>
    tpu.vector_store %arg14[%c0_43, %c0_44], %80 {strides = array<i32>} : memref<8x128xf32, #tpu.memory_space<vmem>>, vector<8x128xf32>,
    return
  }
}

</mosaic_0001>

<llo_original>
// kernel: feedback_controller_cell.1
$region0: #{feedback_controller_cell.1}
  #allocation0 [shape = 'u32[]', space=smem, size = 0x4, offset = 0x4, fixed_abs, tag = 'smem constant byte address 0x4 - core index']
  #allocation1 [shape = 'u32[144,128]{1,0:T(1,128)}', space=vmem, size = 0x12000, scoped, tag = 'internal scratch']
  #allocation2 [shape = 'f32[1,1]{1,0:T(1,128)S(1)}', space=vmem, size = 0x200, scoped, tag = 'scoped memory for feedback_controller_cell.1']
  %s0 = inlined_call_operand.vmem [shape: f32[8,4], index: 0, kind: input, shape index: {}]
  %s1 = inlined_call_operand.vmem [shape: f32[8,32], index: 1, kind: input, shape index: {}]
  %s2 = inlined_call_operand.hbm [shape: f32[8,5], index: 2, kind: input, shape index: {}]
  %s3 = inlined_call_operand.<no memory space> [shape: f32[1,1], index: 3, kind: input, shape index: {}]
  %s4 = inlined_call_operand.vmem [shape: f32[36,128], index: 4, kind: input, shape index: {}]
  %s5 = inlined_call_operand.vmem [shape: f32[1,128], index: 5, kind: input, shape index: {}]
  %s6 = inlined_call_operand.vmem [shape: f32[37,48], index: 6, kind: input, shape index: {}]
  %s7 = inlined_call_operand.vmem [shape: f32[1,48], index: 7, kind: input, shape index: {}]
  %s8 = inlined_call_operand.vmem [shape: f32[48,33], index: 8, kind: input, shape index: {}]
  %s9 = inlined_call_operand.vmem [shape: f32[1,33], index: 9, kind: input, shape index: {}]
  %s10 = inlined_call_operand.vmem [shape: f32[32,32], index: 10, kind: input, shape index: {}]
  %s11 = inlined_call_operand.vmem [shape: f32[1,32], index: 11, kind: input, shape index: {}]
  %s12 = inlined_call_operand.hbm [shape: f32[1,8], index: 12, kind: input, shape index: {}]
  %s13 = inlined_call_operand.vmem [shape: f32[32,4], index: 13, kind: input, shape index: {}]
  %s14 = inlined_call_operand.vmem [shape: f32[8,128], index: 14, kind: output, shape index: {}]
  %s15 = sld [smem:[#allocation0]]
  $region74: #{feedback_controller_cell.1} parent=0
    _
  %s17 = ssub.s32 1, %s15
  %s18 = scalar_select 0, %s17, %s15
  %v19 = vstv %s3
  %20 = vst [vmem:[#allocation2] sm:$0x1] %v19
  $region1: #{feedback_controller_cell.1} parent=0
    #allocation3 [shape = 'u8[4096]{0}', space=vmem, size = 0x1000, scoped, tag = 'input window, operand 2, single buffered']
    #allocation4 [shape = 's32[1]{0}', space=sflag, size = 0x4, scoped, tag = 'scoped memory for feedback_controller_cell.1']
    #allocation5 [shape = 'u8[512]{0}', space=vmem, size = 0x400, scoped, tag = 'input window, operand 12, single buffered']
    #allocation6 [shape = 's32[1]{0}', space=sflag, size = 0x4, scoped, tag = 'scoped memory for feedback_controller_cell.1']
    %21 = vsyncpa [#allocation4], 0
    %22 = vsyncpa [#allocation6], 0
    // Predicated region
    $region2: #{feedback_controller_cell.1} parent=1 // pred_check
      _
    $region3: #{feedback_controller_cell.1} parent=1 // pred_check_branch
      %24 = sbr.rel (0) target = $region5
    $region4: #{feedback_controller_cell.1} parent=1 // pred_region
      _
    $region5: #{feedback_controller_cell.1} parent=1 // pred_fallthru
      _
    // Predicated region
    $region6: #{feedback_controller_cell.1} parent=1 // pred_check
      _
    $region7: #{feedback_controller_cell.1} parent=1 // pred_check_branch
      %26 = sbr.rel (0) target = $region9
    $region8: #{feedback_controller_cell.1} parent=1 // pred_region
      _
    $region9: #{feedback_controller_cell.1} parent=1 // pred_fallthru
      _
    // Predicated region
    $region10: #{feedback_controller_cell.1} parent=1 // pred_check
      _
    $region11: #{feedback_controller_cell.1} parent=1 // pred_check_branch
      %28 = sbr.rel (0) target = $region13
    $region12: #{feedback_controller_cell.1} parent=1 // pred_region
      %s30 = ssub.s32 128, 128
      %31 = vsyncadd [#allocation4], %s30
      %s33 = sshll.u32 [#allocation3], 4
      %s34 = int_to_ptr.vmem [resolvable:$true] %s33
      %36 = dma.hbm_to_vmem [thread:$0]  %s2, 128, %s34, [#allocation4]
    $region13: #{feedback_controller_cell.1} parent=1 // pred_fallthru
      _
    // Predicated region
    $region14: #{feedback_controller_cell.1} parent=1 // pred_check
      _
    $region15: #{feedback_controller_cell.1} parent=1 // pred_check_branch
      %38 = sbr.rel (0) target = $region17
    $region16: #{feedback_controller_cell.1} parent=1 // pred_region
      _
    $region17: #{feedback_controller_cell.1} parent=1 // pred_fallthru
      _
    // Predicated region
    $region18: #{feedback_controller_cell.1} parent=1 // pred_check
      _
    $region19: #{feedback_controller_cell.1} parent=1 // pred_check_branch
      %40 = sbr.rel (0) target = $region21
    $region20: #{feedback_controller_cell.1} parent=1 // pred_region
      _
    $region21: #{feedback_controller_cell.1} parent=1 // pred_fallthru
      _
    // Predicated region
    $region22: #{feedback_controller_cell.1} parent=1 // pred_check
      _
    $region23: #{feedback_controller_cell.1} parent=1 // pred_check_branch
      %42 = sbr.rel (0) target = $region25
    $region24: #{feedback_controller_cell.1} parent=1 // pred_region
      _
    $region25: #{feedback_controller_cell.1} parent=1 // pred_fallthru
      _
    // Predicated region
    $region26: #{feedback_controller_cell.1} parent=1 // pred_check
      _
    $region27: #{feedback_controller_cell.1} parent=1 // pred_check_branch
      %44 = sbr.rel (0) target = $region29
    $region28: #{feedback_controller_cell.1} parent=1 // pred_region
      _
    $region29: #{feedback_controller_cell.1} parent=1 // pred_fallthru
      _
    // Predicated region
    $region30: #{feedback_controller_cell.1} parent=1 // pred_check
      _
    $region31: #{feedback_controller_cell.1} parent=1 // pred_check_branch
      %46 = sbr.rel (0) target = $region33
    $region32: #{feedback_controller_cell.1} parent=1 // pred_region
      _
    $region33: #{feedback_controller_cell.1} parent=1 // pred_fallthru
      _
    // Predicated region
    $region34: #{feedback_controller_cell.1} parent=1 // pred_check
      _
    $region35: #{feedback_controller_cell.1} parent=1 // pred_check_branch
      %48 = sbr.rel (0) target = $region37
    $region36: #{feedback_controller_cell.1} parent=1 // pred_region
      _
    $region37: #{feedback_controller_cell.1} parent=1 // pred_fallthru
      _
    // Predicated region
    $region38: #{feedback_controller_cell.1} parent=1 // pred_check
      _
    $region39: #{feedback_controller_cell.1} parent=1 // pred_check_branch
      %50 = sbr.rel (0) target = $region41
    $region40: #{feedback_controller_cell.1} parent=1 // pred_region
      _
    $region41: #{feedback_controller_cell.1} parent=1 // pred_fallthru
      _
    // Predicated region
    $region42: #{feedback_controller_cell.1} parent=1 // pred_check
      _
    $region43: #{feedback_controller_cell.1} parent=1 // pred_check_branch
      %52 = sbr.rel (0) target = $region45
    $region44: #{feedback_controller_cell.1} parent=1 // pred_region
      _
    $region45: #{feedback_controller_cell.1} parent=1 // pred_fallthru
      _
    // Predicated region
    $region46: #{feedback_controller_cell.1} parent=1 // pred_check
      _
    $region47: #{feedback_controller_cell.1} parent=1 // pred_check_branch
      %54 = sbr.rel (0) target = $region49
    $region48: #{feedback_controller_cell.1} parent=1 // pred_region
      _
    $region49: #{feedback_controller_cell.1} parent=1 // pred_fallthru
      _
    // Predicated region
    $region50: #{feedback_controller_cell.1} parent=1 // pred_check
      _
    $region51: #{feedback_controller_cell.1} parent=1 // pred_check_branch
      %56 = sbr.rel (0) target = $region53
    $region52: #{feedback_controller_cell.1} parent=1 // pred_region
      %s58 = ssub.s32 16, 16
      %59 = vsyncadd [#allocation6], %s58
      %s61 = sshll.u32 [#allocation5], 4
      %s62 = int_to_ptr.vmem [resolvable:$true] %s61
      %64 = dma.hbm_to_vmem [thread:$0]  %s12, 16, %s62, [#allocation6]
    $region53: #{feedback_controller_cell.1} parent=1 // pred_fallthru
      _
    // Predicated region
    $region54: #{feedback_controller_cell.1} parent=1 // pred_check
      _
    $region55: #{feedback_controller_cell.1} parent=1 // pred_check_branch
      %66 = sbr.rel (0) target = $region57
    $region56: #{feedback_controller_cell.1} parent=1 // pred_region
      _
    $region57: #{feedback_controller_cell.1} parent=1 // pred_fallthru
      _
    // Predicated region
    $region58: #{feedback_controller_cell.1} parent=1 // pred_check
      _
    $region59: #{feedback_controller_cell.1} parent=1 // pred_check_branch
      %68 = sbr.rel (0) target = $region61
    $region60: #{feedback_controller_cell.1} parent=1 // pred_region
      %69 = dma.done [#allocation4], 128
    $region61: #{feedback_controller_cell.1} parent=1 // pred_fallthru
      _
    // Predicated region
    $region62: #{feedback_controller_cell.1} parent=1 // pred_check
      _
    $region63: #{feedback_controller_cell.1} parent=1 // pred_check_branch
      %71 = sbr.rel (0) target = $region65
    $region64: #{feedback_controller_cell.1} parent=1 // pred_region
      %72 = dma.done [#allocation6], 16
    $region65: #{feedback_controller_cell.1} parent=1 // pred_fallthru
      _
    %v73 = vld [vmem:[%s0] sm:$0xff]
    %v74 = vld [vmem:[%s1] sm:$0xff]
    %v75 = vld [vmem:[#allocation3] sm:$0xff]
    %v76 = vld [vmem:[#allocation2] sm:$0x1]
    %v77 = vld [vmem:[%s4] sm:$0xff]
    %v78 = vld [vmem:[%s4 + $0x8] sm:$0xff]
    %v79 = vld [vmem:[%s4 + $0x10] sm:$0xff]
    %v80 = vld [vmem:[%s4 + $0x18] sm:$0xff]
    %v81 = vld [vmem:[%s4 + $0x20] sm:$0xf]
    %v82 = vld [vmem:[%s5] sm:$0x1]
    %v83 = vld [vmem:[%s6] sm:$0xff]
    %v84 = vld [vmem:[%s6 + $0x8] sm:$0xff]
    %v85 = vld [vmem:[%s6 + $0x10] sm:$0xff]
    %v86 = vld [vmem:[%s6 + $0x18] sm:$0xff]
    %v87 = vld [vmem:[%s6 + $0x20] sm:$0x1f]
    %v88 = vld [vmem:[%s7] sm:$0x1]
    %v89 = vld [vmem:[%s8] sm:$0xff]
    %v90 = vld [vmem:[%s8 + $0x8] sm:$0xff]
    %v91 = vld [vmem:[%s8 + $0x10] sm:$0xff]
    %v92 = vld [vmem:[%s8 + $0x18] sm:$0xff]
    %v93 = vld [vmem:[%s8 + $0x20] sm:$0xff]
    %v94 = vld [vmem:[%s8 + $0x28] sm:$0xff]
    %v95 = vld [vmem:[%s9] sm:$0x1]
    %v96 = vld [vmem:[%s10] sm:$0xff]
    %v97 = vld [vmem:[%s10 + $0x8] sm:$0xff]
    %v98 = vld [vmem:[%s10 + $0x10] sm:$0xff]
    %v99 = vld [vmem:[%s10 + $0x18] sm:$0xff]
    %v100 = vld [vmem:[%s11] sm:$0x1]
    %v101 = vld [vmem:[#allocation5] sm:$0x1]
    %v102 = vld [vmem:[%s13] sm:$0xff]
    %v103 = vld [vmem:[%s13 + $0x8] sm:$0xff]
    %v104 = vld [vmem:[%s13 + $0x10] sm:$0xff]
    %v105 = vld [vmem:[%s13 + $0x18] sm:$0xff]
    %107 = vrot.lane.b32.xlu0 %v74, 4
    %v108 = vpop.permute.xlu0 %107
    %vm110 = vcmask 31744
    %v111 = vsel %vm110, %v73, %v108
    %v113 = vlaneseq
    %v114 = vshrl.u32 %v113, 7
    %v115 = vsub.s32 0, %v114
    %v116 = vrot.slane %v82, %v115
    %vm118 = vcmask 293888
    %v120 = vsel %vm118, %v111, 0
    %vm122 = vcmask 1043456
    %v124 = vsel %vm122, %v81, 0
    %126 = vmatprep.subr.mxu0 0.0
    %127 = vmatpush1.msra.mxu0 0.0
    %128 = vmatprep.subr.mxu0 0.0
    %129 = vmatpush1.msra.mxu0 0.0
    %130 = vmatprep.subr.mxu0 0.0
    %131 = vmatpush1.msra.mxu0 0.0
    %132 = vmatprep.subr.mxu0 0.0
    %133 = vmatpush1.msra.mxu0 0.0
    %134 = vmatprep.subr.mxu0 0.0
    %135 = vmatpush1.msra.mxu0 0.0
    %136 = vmatprep.subr.mxu0 0.0
    %137 = vmatpush1.msra.mxu0 0.0
    %138 = vmatprep.subr.mxu0 0.0
    %139 = vmatpush1.msra.mxu0 0.0
    %140 = vmatprep.subr.mxu0 0.0
    %141 = vmatpush1.msra.mxu0 0.0
    %142 = vmatprep.subr.mxu0 0.0
    %143 = vmatpush1.msra.mxu0 0.0
    %144 = vmatprep.subr.mxu0 0.0
    %145 = vmatpush1.msra.mxu0 0.0
    %146 = vmatprep.subr.mxu0 0.0
    %147 = vmatpush1.msra.mxu0 0.0
    %148 = vmatprep.subr.mxu0 0.0
    %149 = vmatpush1.msra.mxu0 %v124
    %150 = vmatprep.subr.mxu0 0.0
    %151 = vmatpush1.msra.mxu0 %v80
    %152 = vmatprep.subr.mxu0 0.0
    %153 = vmatpush1.msra.mxu0 %v79
    %154 = vmatprep.subr.mxu0 0.0
    %155 = vmatpush1.msra.mxu0 %v78
    %156 = vmatprep.subr.mxu0 0.0
    %157 = vmatpush1.msra.mxu0 %v77
    %158 = vmatprep.subr.mxu0 0.0
    %159 = vmatpush2.msra.mxu0 0.0
    %160 = vmatprep.subr.mxu0 0.0
    %161 = vmatpush2.msra.mxu0 0.0
    %162 = vmatprep.subr.mxu0 0.0
    %163 = vmatpush2.msra.mxu0 0.0
    %164 = vmatprep.subr.mxu0 0.0
    %165 = vmatpush2.msra.mxu0 0.0
    %166 = vmatprep.subr.mxu0 0.0
    %167 = vmatpush2.msra.mxu0 0.0
    %168 = vmatprep.subr.mxu0 0.0
    %169 = vmatpush2.msra.mxu0 0.0
    %170 = vmatprep.subr.mxu0 0.0
    %171 = vmatpush2.msra.mxu0 0.0
    %172 = vmatprep.subr.mxu0 0.0
    %173 = vmatpush2.msra.mxu0 0.0
    %174 = vmatprep.subr.mxu0 0.0
    %175 = vmatpush2.msra.mxu0 0.0
    %176 = vmatprep.subr.mxu0 0.0
    %177 = vmatpush2.msra.mxu0 0.0
    %178 = vmatprep.subr.mxu0 0.0
    %179 = vmatpush2.msra.mxu0 0.0
    %180 = vmatprep.subr.mxu0 0.0
    %181 = vmatpush2.msra.mxu0 0.0
    %182 = vmatprep.subr.mxu0 0.0
    %183 = vmatpush2.msra.mxu0 0.0
    %184 = vmatprep.subr.mxu0 0.0
    %185 = vmatpush2.msra.mxu0 0.0
    %186 = vmatprep.subr.mxu0 0.0
    %187 = vmatpush2.msra.mxu0 0.0
    %188 = vmatprep.subr.mxu0 0.0
    %189 = vmatpush2.msra.mxu0 0.0
    %190 = vmatprep.mubr.f32.mxu0 0.0
    %191 = vmatmul.mubr.f32.gmra.mxu0 %v120
    %v192 = vpop.f32.mrf.mxu0
    %v193 = vadd.f32 %v116, %v192
    %v194 = vpop.f32.mrf.mxu0
    %195 = vdwg.mxu0
    %v196 = vxor.u32 %v193, 2147483648
    %v197 = vmul.f32 %v196, 1.442695
    %v198 = vpow.pop %v197
    %v199 = vadd.f32 %v198, 1.0
    %v200 = vrcp.pop %v199
    %v201 = vmul.f32 1.0, %v200
    %203 = vrot.lane.b32.xlu0 %v193, 32
    %v204 = vpop.permute.xlu0 %203
    %v206 = vmul.f32 %v201, %v204
    %208 = vrot.lane.b32.xlu0 %v206, 64
    %v209 = vpop.permute.xlu0 %208
    %v211 = vadd.f32 %v193, %v209
    %v212 = vtanh.pop %v211
    %v213 = vsub.f32 1.0, %v201
    %215 = vrot.lane.b32.xlu0 %v212, 96
    %v216 = vpop.permute.xlu0 %215
    %v218 = vmul.f32 %v213, %v216
    %219 = vrot.lane.b32.xlu0 %v74, 32
    %v220 = vpop.permute.xlu0 %219
    %v222 = vmul.f32 %v201, %v220
    %v223 = vadd.f32 %v218, %v222
    %225 = vrot.lane.b32.xlu0 %v223, 101
    %v226 = vpop.permute.xlu0 %225
    %vm228 = vcmask 39936
    %v229 = vsel %vm228, %v75, %v226
    %v231 = vlaneseq
    %v232 = vshrl.u32 %v231, 7
    %v233 = vsub.s32 0, %v232
    %v234 = vrot.slane %v88, %v233
    %vm236 = vcmask 302080
    %v238 = vsel %vm236, %v229, 0
    %vm240 = vcmask 1044480
    %v242 = vsel %vm240, %v87, 0
    %244 = vmatprep.subr.mxu0 0.0
    %245 = vmatpush1.msra.mxu0 0.0
    %246 = vmatprep.subr.mxu0 0.0
    %247 = vmatpush1.msra.mxu0 0.0
    %248 = vmatprep.subr.mxu0 0.0
    %249 = vmatpush1.msra.mxu0 0.0
    %250 = vmatprep.subr.mxu0 0.0
    %251 = vmatpush1.msra.mxu0 0.0
    %252 = vmatprep.subr.mxu0 0.0
    %253 = vmatpush1.msra.mxu0 0.0
    %254 = vmatprep.subr.mxu0 0.0
    %255 = vmatpush1.msra.mxu0 0.0
    %256 = vmatprep.subr.mxu0 0.0
    %257 = vmatpush1.msra.mxu0 0.0
    %258 = vmatprep.subr.mxu0 0.0
    %259 = vmatpush1.msra.mxu0 0.0
    %260 = vmatprep.subr.mxu0 0.0
    %261 = vmatpush1.msra.mxu0 0.0
    %262 = vmatprep.subr.mxu0 0.0
    %263 = vmatpush1.msra.mxu0 0.0
    %264 = vmatprep.subr.mxu0 0.0
    %265 = vmatpush1.msra.mxu0 0.0
    %266 = vmatprep.subr.mxu0 0.0
    %267 = vmatpush1.msra.mxu0 %v242
    %268 = vmatprep.subr.mxu0 0.0
    %269 = vmatpush1.msra.mxu0 %v86
    %270 = vmatprep.subr.mxu0 0.0
    %271 = vmatpush1.msra.mxu0 %v85
    %272 = vmatprep.subr.mxu0 0.0
    %273 = vmatpush1.msra.mxu0 %v84
    %274 = vmatprep.subr.mxu0 0.0
    %275 = vmatpush1.msra.mxu0 %v83
    %276 = vmatprep.subr.mxu0 0.0
    %277 = vmatpush2.msra.mxu0 0.0
    %278 = vmatprep.subr.mxu0 0.0
    %279 = vmatpush2.msra.mxu0 0.0
    %280 = vmatprep.subr.mxu0 0.0
    %281 = vmatpush2.msra.mxu0 0.0
    %282 = vmatprep.subr.mxu0 0.0
    %283 = vmatpush2.msra.mxu0 0.0
    %284 = vmatprep.subr.mxu0 0.0
    %285 = vmatpush2.msra.mxu0 0.0
    %286 = vmatprep.subr.mxu0 0.0
    %287 = vmatpush2.msra.mxu0 0.0
    %288 = vmatprep.subr.mxu0 0.0
    %289 = vmatpush2.msra.mxu0 0.0
    %290 = vmatprep.subr.mxu0 0.0
    %291 = vmatpush2.msra.mxu0 0.0
    %292 = vmatprep.subr.mxu0 0.0
    %293 = vmatpush2.msra.mxu0 0.0
    %294 = vmatprep.subr.mxu0 0.0
    %295 = vmatpush2.msra.mxu0 0.0
    %296 = vmatprep.subr.mxu0 0.0
    %297 = vmatpush2.msra.mxu0 0.0
    %298 = vmatprep.subr.mxu0 0.0
    %299 = vmatpush2.msra.mxu0 0.0
    %300 = vmatprep.subr.mxu0 0.0
    %301 = vmatpush2.msra.mxu0 0.0
    %302 = vmatprep.subr.mxu0 0.0
    %303 = vmatpush2.msra.mxu0 0.0
    %304 = vmatprep.subr.mxu0 0.0
    %305 = vmatpush2.msra.mxu0 0.0
    %306 = vmatprep.subr.mxu0 0.0
    %307 = vmatpush2.msra.mxu0 0.0
    %308 = vmatprep.mubr.f32.mxu0 0.0
    %309 = vmatmul.mubr.f32.gmra.mxu0 %v238
    %v310 = vpop.f32.mrf.mxu0
    %v311 = vadd.f32 %v234, %v310
    %v312 = vpop.f32.mrf.mxu0
    %313 = vdwg.mxu0
    %v314 = vmax.f32 %v311, 0.0
    %v316 = vlaneseq
    %v317 = vshrl.u32 %v316, 7
    %v318 = vsub.s32 0, %v317
    %v319 = vrot.slane %v95, %v318
    %vm321 = vcmask 392192
    %v323 = vsel %vm321, %v314, 0
    %325 = vmatprep.subr.mxu0 0.0
    %326 = vmatpush1.msra.mxu0 0.0
    %327 = vmatprep.subr.mxu0 0.0
    %328 = vmatpush1.msra.mxu0 0.0
    %329 = vmatprep.subr.mxu0 0.0
    %330 = vmatpush1.msra.mxu0 0.0
    %331 = vmatprep.subr.mxu0 0.0
    %332 = vmatpush1.msra.mxu0 0.0
    %333 = vmatprep.subr.mxu0 0.0
    %334 = vmatpush1.msra.mxu0 0.0
    %335 = vmatprep.subr.mxu0 0.0
    %336 = vmatpush1.msra.mxu0 0.0
    %337 = vmatprep.subr.mxu0 0.0
    %338 = vmatpush1.msra.mxu0 0.0
    %339 = vmatprep.subr.mxu0 0.0
    %340 = vmatpush1.msra.mxu0 0.0
    %341 = vmatprep.subr.mxu0 0.0
    %342 = vmatpush1.msra.mxu0 0.0
    %343 = vmatprep.subr.mxu0 0.0
    %344 = vmatpush1.msra.mxu0 0.0
    %345 = vmatprep.subr.mxu0 0.0
    %346 = vmatpush1.msra.mxu0 %v94
    %347 = vmatprep.subr.mxu0 0.0
    %348 = vmatpush1.msra.mxu0 %v93
    %349 = vmatprep.subr.mxu0 0.0
    %350 = vmatpush1.msra.mxu0 %v92
    %351 = vmatprep.subr.mxu0 0.0
    %352 = vmatpush1.msra.mxu0 %v91
    %353 = vmatprep.subr.mxu0 0.0
    %354 = vmatpush1.msra.mxu0 %v90
    %355 = vmatprep.subr.mxu0 0.0
    %356 = vmatpush1.msra.mxu0 %v89
    %357 = vmatprep.subr.mxu0 0.0
    %358 = vmatpush2.msra.mxu0 0.0
    %359 = vmatprep.subr.mxu0 0.0
    %360 = vmatpush2.msra.mxu0 0.0
    %361 = vmatprep.subr.mxu0 0.0
    %362 = vmatpush2.msra.mxu0 0.0
    %363 = vmatprep.subr.mxu0 0.0
    %364 = vmatpush2.msra.mxu0 0.0
    %365 = vmatprep.subr.mxu0 0.0
    %366 = vmatpush2.msra.mxu0 0.0
    %367 = vmatprep.subr.mxu0 0.0
    %368 = vmatpush2.msra.mxu0 0.0
    %369 = vmatprep.subr.mxu0 0.0
    %370 = vmatpush2.msra.mxu0 0.0
    %371 = vmatprep.subr.mxu0 0.0
    %372 = vmatpush2.msra.mxu0 0.0
    %373 = vmatprep.subr.mxu0 0.0
    %374 = vmatpush2.msra.mxu0 0.0
    %375 = vmatprep.subr.mxu0 0.0
    %376 = vmatpush2.msra.mxu0 0.0
    %377 = vmatprep.subr.mxu0 0.0
    %378 = vmatpush2.msra.mxu0 0.0
    %379 = vmatprep.subr.mxu0 0.0
    %380 = vmatpush2.msra.mxu0 0.0
    %381 = vmatprep.subr.mxu0 0.0
    %382 = vmatpush2.msra.mxu0 0.0
    %383 = vmatprep.subr.mxu0 0.0
    %384 = vmatpush2.msra.mxu0 0.0
    %385 = vmatprep.subr.mxu0 0.0
    %386 = vmatpush2.msra.mxu0 0.0
    %387 = vmatprep.subr.mxu0 0.0
    %388 = vmatpush2.msra.mxu0 0.0
    %389 = vmatprep.mubr.f32.mxu0 0.0
    %390 = vmatmul.mubr.f32.gmra.mxu0 %v323
    %v391 = vpop.f32.mrf.mxu0
    %v392 = vadd.f32 %v319, %v391
    %v393 = vpop.f32.mrf.mxu0
    %394 = vdwg.mxu0
    %v395 = vmax.f32 %v392, 0.0
    %v397 = vlaneseq
    %v398 = vshrl.u32 %v397, 7
    %v399 = vsub.s32 0, %v398
    %v400 = vrot.slane %v100, %v399
    %vm402 = vcmask 261120
    %v404 = vsel %vm402, %v395, 0
    %406 = vmatprep.subr.mxu0 0.0
    %407 = vmatpush1.msra.mxu0 0.0
    %408 = vmatprep.subr.mxu0 0.0
    %409 = vmatpush1.msra.mxu0 0.0
    %410 = vmatprep.subr.mxu0 0.0
    %411 = vmatpush1.msra.mxu0 0.0
    %412 = vmatprep.subr.mxu0 0.0
    %413 = vmatpush1.msra.mxu0 0.0
    %414 = vmatprep.subr.mxu0 0.0
    %415 = vmatpush1.msra.mxu0 0.0
    %416 = vmatprep.subr.mxu0 0.0
    %417 = vmatpush1.msra.mxu0 0.0
    %418 = vmatprep.subr.mxu0 0.0
    %419 = vmatpush1.msra.mxu0 0.0
    %420 = vmatprep.subr.mxu0 0.0
    %421 = vmatpush1.msra.mxu0 0.0
    %422 = vmatprep.subr.mxu0 0.0
    %423 = vmatpush1.msra.mxu0 0.0
    %424 = vmatprep.subr.mxu0 0.0
    %425 = vmatpush1.msra.mxu0 0.0
    %426 = vmatprep.subr.mxu0 0.0
    %427 = vmatpush1.msra.mxu0 0.0
    %428 = vmatprep.subr.mxu0 0.0
    %429 = vmatpush1.msra.mxu0 0.0
    %430 = vmatprep.subr.mxu0 0.0
    %431 = vmatpush1.msra.mxu0 %v99
    %432 = vmatprep.subr.mxu0 0.0
    %433 = vmatpush1.msra.mxu0 %v98
    %434 = vmatprep.subr.mxu0 0.0
    %435 = vmatpush1.msra.mxu0 %v97
    %436 = vmatprep.subr.mxu0 0.0
    %437 = vmatpush1.msra.mxu0 %v96
    %438 = vmatprep.subr.mxu0 0.0
    %439 = vmatpush2.msra.mxu0 0.0
    %440 = vmatprep.subr.mxu0 0.0
    %441 = vmatpush2.msra.mxu0 0.0
    %442 = vmatprep.subr.mxu0 0.0
    %443 = vmatpush2.msra.mxu0 0.0
    %444 = vmatprep.subr.mxu0 0.0
    %445 = vmatpush2.msra.mxu0 0.0
    %446 = vmatprep.subr.mxu0 0.0
    %447 = vmatpush2.msra.mxu0 0.0
    %448 = vmatprep.subr.mxu0 0.0
    %449 = vmatpush2.msra.mxu0 0.0
    %450 = vmatprep.subr.mxu0 0.0
    %451 = vmatpush2.msra.mxu0 0.0
    %452 = vmatprep.subr.mxu0 0.0
    %453 = vmatpush2.msra.mxu0 0.0
    %454 = vmatprep.subr.mxu0 0.0
    %455 = vmatpush2.msra.mxu0 0.0
    %456 = vmatprep.subr.mxu0 0.0
    %457 = vmatpush2.msra.mxu0 0.0
    %458 = vmatprep.subr.mxu0 0.0
    %459 = vmatpush2.msra.mxu0 0.0
    %460 = vmatprep.subr.mxu0 0.0
    %461 = vmatpush2.msra.mxu0 0.0
    %462 = vmatprep.subr.mxu0 0.0
    %463 = vmatpush2.msra.mxu0 0.0
    %464 = vmatprep.subr.mxu0 0.0
    %465 = vmatpush2.msra.mxu0 0.0
    %466 = vmatprep.subr.mxu0 0.0
    %467 = vmatpush2.msra.mxu0 0.0
    %468 = vmatprep.subr.mxu0 0.0
    %469 = vmatpush2.msra.mxu0 0.0
    %470 = vmatprep.mubr.f32.mxu0 0.0
    %471 = vmatmul.mubr.f32.gmra.mxu0 %v404
    %v472 = vpop.f32.mrf.mxu0
    %v473 = vadd.f32 %v400, %v472
    %v474 = vpop.f32.mrf.mxu0
    %475 = vdwg.mxu0
    %v476 = vmul.f32 %v392, 0.16666667
    %v477 = vadd.f32 %v476, 0.5
    %v478 = vmax.f32 %v477, 0.0
    %v479 = vmin.f32 %v478, 1.0
    %v481 = vlaneseq
    %v482 = vshrl.u32 %v481, 7
    %v483 = vsub.s32 0, %v482
    %v484 = vrot.slane %v76, %v483
    %485 = vrot.lane.b32.xlu0 %v484, 32
    %v486 = vpop.permute.xlu0 %485
    %v488 = vadd.f32 %v479, %v486
    %490 = vset.pattern.permute.xlu0 32
    %491 = vperm.xlu0 %490, %v488
    %v492 = vpop.permute.xlu0 %491
    %v495 = vlaneseq
    %v496 = vshrl.u32 %v495, 7
    %v497 = vsub.s32 0, %v496
    %v498 = vrot.slane %v101, %v497
    %v500 = vsub.f32 %v492, %v498
    %v501 = vmul.f32 %v500, %v500
    %v502 = vmul.f32 %v501, -41.666668
    %v503 = vmul.f32 %v502, 1.442695
    %v504 = vpow.pop %v503
    %vm505 = vcmask 64512
    %v506 = vsel %vm505, %v504, 0.0
    %507 = vadd.xlane.f32.xlu0 %v506
    %v508 = vpop.xlane.xlu0 %507
    %v509 = vadd.f32 %v508, 1e-08
    %v510 = vrcp.pop %v509
    %v511 = vmul.f32 %v504, %v510
    %513 = vrot.lane.b32.xlu0 %v511, 8
    %v514 = vpop.permute.xlu0 %513
    %516 = vrot.lane.b32.xlu0 %v511, 16
    %v517 = vpop.permute.xlu0 %516
    %519 = vrot.lane.b32.xlu0 %v511, 24
    %v520 = vpop.permute.xlu0 %519
    %v522 = vsel %vm505, %v511, %v514
    %vm523 = vcmask 130048
    %v524 = vsel %vm523, %v522, %v517
    %vm525 = vcmask 195584
    %v526 = vsel %vm525, %v524, %v520
    %v527 = vmul.f32 %v473, %v526
    %v529 = vsel %vm402, %v527, 0
    %531 = vmatprep.subr.mxu0 0.0
    %532 = vmatpush1.msra.mxu0 0.0
    %533 = vmatprep.subr.mxu0 0.0
    %534 = vmatpush1.msra.mxu0 0.0
    %535 = vmatprep.subr.mxu0 0.0
    %536 = vmatpush1.msra.mxu0 0.0
    %537 = vmatprep.subr.mxu0 0.0
    %538 = vmatpush1.msra.mxu0 0.0
    %539 = vmatprep.subr.mxu0 0.0
    %540 = vmatpush1.msra.mxu0 0.0
    %541 = vmatprep.subr.mxu0 0.0
    %542 = vmatpush1.msra.mxu0 0.0
    %543 = vmatprep.subr.mxu0 0.0
    %544 = vmatpush1.msra.mxu0 0.0
    %545 = vmatprep.subr.mxu0 0.0
    %546 = vmatpush1.msra.mxu0 0.0
    %547 = vmatprep.subr.mxu0 0.0
    %548 = vmatpush1.msra.mxu0 0.0
    %549 = vmatprep.subr.mxu0 0.0
    %550 = vmatpush1.msra.mxu0 0.0
    %551 = vmatprep.subr.mxu0 0.0
    %552 = vmatpush1.msra.mxu0 0.0
    %553 = vmatprep.subr.mxu0 0.0
    %554 = vmatpush1.msra.mxu0 0.0
    %555 = vmatprep.subr.mxu0 0.0
    %556 = vmatpush1.msra.mxu0 %v105
    %557 = vmatprep.subr.mxu0 0.0
    %558 = vmatpush1.msra.mxu0 %v104
    %559 = vmatprep.subr.mxu0 0.0
    %560 = vmatpush1.msra.mxu0 %v103
    %561 = vmatprep.subr.mxu0 0.0
    %562 = vmatpush1.msra.mxu0 %v102
    %563 = vmatprep.subr.mxu0 0.0
    %564 = vmatpush2.msra.mxu0 0.0
    %565 = vmatprep.subr.mxu0 0.0
    %566 = vmatpush2.msra.mxu0 0.0
    %567 = vmatprep.subr.mxu0 0.0
    %568 = vmatpush2.msra.mxu0 0.0
    %569 = vmatprep.subr.mxu0 0.0
    %570 = vmatpush2.msra.mxu0 0.0
    %571 = vmatprep.subr.mxu0 0.0
    %572 = vmatpush2.msra.mxu0 0.0
    %573 = vmatprep.subr.mxu0 0.0
    %574 = vmatpush2.msra.mxu0 0.0
    %575 = vmatprep.subr.mxu0 0.0
    %576 = vmatpush2.msra.mxu0 0.0
    %577 = vmatprep.subr.mxu0 0.0
    %578 = vmatpush2.msra.mxu0 0.0
    %579 = vmatprep.subr.mxu0 0.0
    %580 = vmatpush2.msra.mxu0 0.0
    %581 = vmatprep.subr.mxu0 0.0
    %582 = vmatpush2.msra.mxu0 0.0
    %583 = vmatprep.subr.mxu0 0.0
    %584 = vmatpush2.msra.mxu0 0.0
    %585 = vmatprep.subr.mxu0 0.0
    %586 = vmatpush2.msra.mxu0 0.0
    %587 = vmatprep.subr.mxu0 0.0
    %588 = vmatpush2.msra.mxu0 0.0
    %589 = vmatprep.subr.mxu0 0.0
    %590 = vmatpush2.msra.mxu0 0.0
    %591 = vmatprep.subr.mxu0 0.0
    %592 = vmatpush2.msra.mxu0 0.0
    %593 = vmatprep.subr.mxu0 0.0
    %594 = vmatpush2.msra.mxu0 0.0
    %595 = vmatprep.mubr.f32.mxu0 0.0
    %596 = vmatmul.mubr.f32.gmra.mxu0 %v529
    %v597 = vpop.f32.mrf.mxu0
    %v598 = vadd.f32 0.0, %v597
    %v599 = vpop.f32.mrf.mxu0
    %600 = vdwg.mxu0
    %601 = vrot.lane.b32.xlu0 %v223, 96
    %v602 = vpop.permute.xlu0 %601
    %605 = vrot.lane.b32.xlu0 %v473, 32
    %v606 = vpop.permute.xlu0 %605
    %608 = vrot.lane.b32.xlu0 %v488, 32
    %v609 = vpop.permute.xlu0 %608
    %612 = vrot.lane.b32.xlu0 %v598, 65
    %v613 = vpop.permute.xlu0 %612
    %v615 = vsel %vm402, %v602, %v606
    %vm616 = vcmask 523264
    %v617 = vsel %vm616, %v615, %v609
    %vm618 = vcmask 531456
    %v619 = vsel %vm618, %v617, %v613
    %vm620 = vcmask 564224
    %v621 = vsel %vm620, %v619, 0.0
    %622 = vst [vmem:[%s14] sm:$0xff] %v621
    // Predicated region
    $region66: #{feedback_controller_cell.1} parent=1 // pred_check
      _
    $region67: #{feedback_controller_cell.1} parent=1 // pred_check_branch
      %624 = sbr.rel (0) target = $region69
    $region68: #{feedback_controller_cell.1} parent=1 // pred_region
      _
    $region69: #{feedback_controller_cell.1} parent=1 // pred_fallthru
      _
    // Predicated region
    $region70: #{feedback_controller_cell.1} parent=1 // pred_check
      _
    $region71: #{feedback_controller_cell.1} parent=1 // pred_check_branch
      %626 = sbr.rel (0) target = $region73
    $region72: #{feedback_controller_cell.1} parent=1 // pred_region
      _
    $region73: #{feedback_controller_cell.1} parent=1 // pred_fallthru
      _
    %627 = vsyncpa [#allocation4], 1
    %628 = vsyncpa [#allocation6], 1

</llo_original>
